<compile_context>
chip_gen: v6e
topology: v6e:2x2x1
jax: 0.10.0
libtpu: 0.0.40
codegen_flags: <defaults>
</compile_context>

<pallas_src>
import functools

import jax
import jax.numpy as jnp
from jax.experimental import pallas as pl
from jax.experimental.pallas import tpu as pltpu


def _round_up(x, m):
    return ((x + m - 1) // m) * m


def _pad_to(x, target_shape):
    pads = [(0, t - s) for s, t in zip(x.shape, target_shape)]
    if any(p[1] for p in pads):
        x = jnp.pad(x, pads)
    return x


def _vmem_capacity_bytes():
    # Generation aware: 128 MiB on v5e/v6e, 64 MiB per TensorCore on v7x.
    try:
        return int(pltpu.get_tpu_info().vmem_capacity_bytes)
    except Exception:
        return 64 * 1024 * 1024  # conservative fallback (v7x per-core figure)


def _sdpa_kernel(q_ref, k_ref, v_ref, ctx_ref, scores_ref, m_sc, l_sc, acc_sc, *,
                 scale, lk_valid, tk, num_k, needs_mask, qk_dtype, pv_dtype):
    # Tiles (batch squeezed by BlockSpec):
    #   q_ref: (TQ, D)  k_ref: (TK, D)  v_ref: (TK, Dv)
    #   ctx_ref: (TQ, Dv)  scores_ref: (TQ, TK)
    kt = pl.program_id(2)

    @pl.when(kt == 0)
    def _():
        m_sc[...] = jnp.full(m_sc.shape, -jnp.inf, dtype=m_sc.dtype)
        l_sc[...] = jnp.zeros(l_sc.shape, dtype=l_sc.dtype)
        acc_sc[...] = jnp.zeros(acc_sc.shape, dtype=acc_sc.dtype)

    q = q_ref[...]
    k = k_ref[...]
    if qk_dtype is not None:
        q = q.astype(qk_dtype)
        k = k.astype(qk_dtype)

    # Q @ K^T for this (q, k) tile: contract the last dims (no K transpose).
    s = jax.lax.dot_general(
        q, k,
        dimension_numbers=(((1,), (1,)), ((), ())),
        preferred_element_type=jnp.float32,
    )  # (TQ, TK), f32

    # Raw (pre-scale, pre-softmax) logits, exactly as the PyTorch module returns.
    scores_ref[...] = s.astype(scores_ref.dtype)

    # Static Python truthiness matches `if scale:` in torch (0.0 / None skip).
    if scale:
        s = s * jnp.float32(scale)

    if needs_mask:
        # Only the final k tile holds padded key columns; `limit >= tk`
        # everywhere else so the select is a no-op there.
        col = jax.lax.broadcasted_iota(jnp.int32, s.shape, 1)
        limit = lk_valid - kt * tk
        s = jnp.where(col < limit, s, -jnp.inf)

    # Online-softmax update.
    m_prev = m_sc[...]
    m_new = jnp.maximum(m_prev, jnp.max(s, axis=-1, keepdims=True))
    alpha = jnp.exp(m_prev - m_new)
    p = jnp.exp(s - m_new)
    l_sc[...] = alpha * l_sc[...] + jnp.sum(p, axis=-1, keepdims=True)

    v = v_ref[...]
    p_dtype = pv_dtype if pv_dtype is not None else v.dtype
    pv = jax.lax.dot_general(
        p.astype(p_dtype), v.astype(p_dtype),
        dimension_numbers=(((1,), (0,)), ((), ())),
        preferred_element_type=jnp.float32,
    )  # (TQ, Dv), f32
    acc_sc[...] = alpha * acc_sc[...] + pv
    m_sc[...] = m_new

    @pl.when(kt == num_k - 1)
    def _():
        # EUP approximate reciprocal in the low-precision path (effectively free);
        # exact reciprocal in the strict-f32 path.
        approx = pv_dtype is not None and jnp.dtype(pv_dtype).itemsize < 4
        inv_l = pl.reciprocal(l_sc[...], approx=approx)
        ctx_ref[...] = (acc_sc[...] * inv_l).astype(ctx_ref.dtype)


def scaled_dot_product_attention(Q, K, V, scale=None, *,
                                 qk_mxu_dtype=None,
                                 pv_mxu_dtype=jnp.bfloat16):
    """Pallas TPU implementation of Scaled_Dot_Product_Attention.forward.

    Q: (B, Lq, D), K: (B, Lk, D), V: (B, Lk, Dv).
    Returns (context (B, Lq, Dv), attention_scores (B, Lq, Lk) raw logits).

    `scale` must be a static Python number (or None), as in the PyTorch module.
    `pv_mxu_dtype` (default bf16) sets the P@V MXU input precision (f32 accum);
    `qk_mxu_dtype=None` (default) keeps Q.K^T — and hence attention_scores — f32.
    """
    B, Lq, D = Q.shape
    Bk, Lk, Dk = K.shape
    Bv, Lkv, Dv = V.shape
    assert B == Bk == Bv and D == Dk and Lk == Lkv

    if scale is not None:
        try:
            scale = float(scale)  # traced values raise -> must be static
        except Exception as e:
            raise TypeError(
                "scale must be a static Python number or None (matching the "
                "PyTorch module's `if scale:`)") from e

    scores_dtype = jnp.promote_types(Q.dtype, K.dtype)
    ctx_dtype = jnp.promote_types(scores_dtype, V.dtype)

    # ---- k tiling: bound VMEM independent of Lk -----------------------------
    if Lk <= 512:
        TK, Lk_p = Lk, Lk            # single k tile, no padding, no mask
    else:
        Lk_p = _round_up(Lk, 128)    # lane-dense scores tiles
        TK = next(t for t in (512, 384, 256, 128) if Lk_p % t == 0)
    num_k = Lk_p // TK
    needs_mask = Lk_p != Lk

    # ---- q tiling: MXU M-tile aligned when Lq is large ----------------------
    if Lq >= 512:
        TQ = 512
    elif Lq >= 256:
        TQ = 256
    else:
        TQ = _round_up(Lq, 8)

    q_isz = jnp.dtype(Q.dtype).itemsize
    k_isz = jnp.dtype(K.dtype).itemsize
    v_isz = jnp.dtype(V.dtype).itemsize
    c_isz = jnp.dtype(ctx_dtype).itemsize
    s_isz = jnp.dtype(scores_dtype).itemsize

    def footprint(tq, tk):
        # Double-buffered pipeline buffers (inputs + outputs).
        bufs = 2 * (tq * D * q_isz + tk * D * k_isz + tk * Dv * v_isz
                    + tq * Dv * c_isz + tq * tk * s_isz)
        # Persistent scratch: m, l (lane-padded), f32 accumulator.
        scratch = 2 * tq * 128 * 4 + tq * Dv * 4
        # Compiler-managed temporaries: s (f32), p (f32), misc + MXU cast of p.
        temps = 3 * tq * tk * 4 + tq * tk * 2
        return bufs + scratch + temps

    vmem_cap = _vmem_capacity_bytes()
    budget = max(16 * 1024 * 1024, int(0.65 * vmem_cap))
    while TQ > 8 and footprint(TQ, TK) > budget:
        TQ = max(8, _round_up(TQ // 2, 8))
    Lq_p = _round_up(Lq, TQ)

    # Always pass an explicit scoped-VMEM limit (v5e default is only 16 MiB).
    vmem_limit = int(min(int(0.95 * vmem_cap),
                         max(32 * 1024 * 1024,
                             footprint(TQ, TK) + 8 * 1024 * 1024)))

    # Only pad what is strictly needed (no D / Dv padding at all).
    Qp = _pad_to(Q, (B, Lq_p, D))
    Kp = _pad_to(K, (B, Lk_p, D))
    Vp = _pad_to(V, (B, Lk_p, Dv))

    kernel = functools.partial(
        _sdpa_kernel,
        scale=scale, lk_valid=Lk, tk=TK, num_k=num_k, needs_mask=needs_mask,
        qk_dtype=qk_mxu_dtype, pv_dtype=pv_mxu_dtype)

    grid = (B, Lq_p // TQ, num_k)

    out_shapes = (
        jax.ShapeDtypeStruct((B, Lq_p, Dv), ctx_dtype),      # context
        jax.ShapeDtypeStruct((B, Lq_p, Lk_p), scores_dtype),  # raw logits
    )

    ctx_p, scores_p = pl.pallas_call(
        kernel,
        out_shape=out_shapes,
        grid_spec=pltpu.PrefetchScalarGridSpec(
            num_scalar_prefetch=0,
            grid=grid,
            in_specs=[
                # Q stays resident across the k axis; K/V move with the k tile.
                pl.BlockSpec((None, TQ, D), lambda b, q, kt: (b, q, 0)),
                pl.BlockSpec((None, TK, D), lambda b, q, kt: (b, kt, 0)),
                pl.BlockSpec((None, TK, Dv), lambda b, q, kt: (b, kt, 0)),
            ],
            out_specs=[
                # Context block constant across k -> accumulator, written on the
                # last k step.  Scores stream out one (TQ, TK) tile per k step.
                pl.BlockSpec((None, TQ, Dv), lambda b, q, kt: (b, q, 0)),
                pl.BlockSpec((None, TQ, TK), lambda b, q, kt: (b, q, kt)),
            ],
            scratch_shapes=[
                pltpu.VMEM((TQ, 1), jnp.float32),   # running max m
                pltpu.VMEM((TQ, 1), jnp.float32),   # running denom l
                pltpu.VMEM((TQ, Dv), jnp.float32),  # running accumulator
            ],
        ),
        compiler_params=pltpu.CompilerParams(
            dimension_semantics=("parallel", "parallel", "arbitrary"),
            vmem_limit_bytes=vmem_limit,
        ),
    )(Qp, Kp, Vp)

    context = ctx_p if Lq_p == Lq else ctx_p[:, :Lq, :]
    scores = scores_p
    if Lq_p != Lq or Lk_p != Lk:
        scores = scores_p[:, :Lq, :Lk]
    return context, scores


def _reference(Q, K, V, scale=None):
    # Pure-JAX reference matching the PyTorch forward exactly.
    attention = jnp.einsum("bqd,bkd->bqk", Q, K)
    attention_scores = attention
    if scale:
        attention = attention * scale
    attention = jax.nn.softmax(attention, axis=-1)
    context = jnp.einsum("bqk,bkd->bqd", attention, V)
    return context, attention_scores


if __name__ == "__main__":
    key = jax.random.PRNGKey(0)
    kq, kk, kv = jax.random.split(key, 3)

    # Small shapes consistent with the module's generic (B, L, D) attention.
    B, Lq, Lk, D, Dv = 2, 8, 8, 32, 32
    Q = jax.random.normal(kq, (B, Lq, D), dtype=jnp.float32)
    K = jax.random.normal(kk, (B, Lk, D), dtype=jnp.float32)
    V = jax.random.normal(kv, (B, Lk, Dv), dtype=jnp.float32)
    scale = 1.0 / (D ** 0.5)

    ref_ctx, ref_scores = _reference(Q, K, V, scale=scale)

    # 1) Default path: bf16 P@V on the MXU, f32 scores / accumulation.
    ctx, scores = scaled_dot_product_attention(Q, K, V, scale=scale)
    jax.block_until_ready((ctx, scores))
    assert ctx.shape == (B, Lq, Dv) and scores.shape == (B, Lq, Lk)
    assert jnp.allclose(scores, ref_scores, atol=1e-4, rtol=1e-4), "scores mismatch"
    assert jnp.allclose(ctx, ref_ctx, atol=2e-2, rtol=2e-2), "context mismatch (bf16 P@V)"

    # 2) Strict-f32 path.
    ctx_f32, scores_f32 = scaled_dot_product_attention(
        Q, K, V, scale=scale, pv_mxu_dtype=None)
    jax.block_until_ready((ctx_f32, scores_f32))
    assert jnp.allclose(ctx_f32, ref_ctx, atol=1e-4, rtol=1e-4), "context mismatch (f32)"
    assert jnp.allclose(scores_f32, ref_scores, atol=1e-4, rtol=1e-4)

    # 3) scale=None path (no scaling applied, like the PyTorch module).
    ctx2, scores2 = scaled_dot_product_attention(Q, K, V, scale=None, pv_mxu_dtype=None)
    jax.block_until_ready((ctx2, scores2))
    ref_ctx2, ref_scores2 = _reference(Q, K, V, scale=None)
    assert jnp.allclose(ctx2, ref_ctx2, atol=1e-4, rtol=1e-4)
    assert jnp.allclose(scores2, ref_scores2, atol=1e-4, rtol=1e-4)

    # 4) Multi-k-tile + padded-key masking path (Lk > 512, Lk % 128 != 0).
    B2, Lq2, Lk2, D2, Dv2 = 1, 40, 700, 32, 64
    k1, k2, k3 = jax.random.split(jax.random.PRNGKey(1), 3)
    Q2 = jax.random.normal(k1, (B2, Lq2, D2), dtype=jnp.float32)
    K2 = jax.random.normal(k2, (B2, Lk2, D2), dtype=jnp.float32)
    V2 = jax.random.normal(k3, (B2, Lk2, Dv2), dtype=jnp.float32)
    V2 = V2.at[..., -1].set(1.0)   # softmax rows sum to 1 -> last ctx column == 1
    s2 = 1.0 / (D2 ** 0.5)
    ctx3, scores3 = scaled_dot_product_attention(Q2, K2, V2, scale=s2, pv_mxu_dtype=None)
    jax.block_until_ready((ctx3, scores3))
    ref_ctx3, ref_scores3 = _reference(Q2, K2, V2, scale=s2)
    assert ctx3.shape == (B2, Lq2, Dv2) and scores3.shape == (B2, Lq2, Lk2)
    # Decisive check that padded key columns are excluded from the softmax.
    assert jnp.allclose(ctx3[..., -1], 1.0, atol=5e-3), "padded-key mask broken"
    assert jnp.allclose(scores3, ref_scores3, atol=1e-1, rtol=1e-2), "k-tiled scores mismatch"
    assert jnp.allclose(ctx3, ref_ctx3, atol=5e-3, rtol=5e-2), "k-tiled context mismatch"

    print("KERNEL_OK")
</pallas_src>

<mosaic_0001>
module attributes {stable_mosaic.version = 11 : i64} {
  func.func @_sdpa_kernel(%arg0: i32, %arg1: i32, %arg2: i32, %arg3: memref<1x8x32xf32, #tpu.memory_space<vmem>>, %arg4: memref<1x8x32xf32, #tpu.memory_space<vmem>>, %arg5: memref<1x8x32xf32, #tpu.memory_space<vmem>>, %arg6: memref<1x8x32xf32, #tpu.memory_space<vmem>>, %arg7: memref<1x8x8xf32, #tpu.memory_space<vmem>>, %arg8: memref<8x1xf32, #tpu.memory_space<vmem>>, %arg9: memref<8x1xf32, #tpu.memory_space<vmem>>, %arg10: memref<8x32xf32, #tpu.memory_space<vmem>>) attributes {dimension_semantics = [#tpu.dimension_semantics<parallel>, #tpu.dimension_semantics<parallel>, #tpu.dimension_semantics<arbitrary>], iteration_bounds = array<i64: 2, 1, 1>, scalar_prefetch = 0 : i64, scratch_operands = 3 : i64, tpu.core_type = #tpu.core_type<tc>, window_params = [{transform_indices = @transform_0, window_bounds = array<i64: 1, 8, 32>}, {transform_indices = @transform_1, window_bounds = array<i64: 1, 8, 32>}, {transform_indices = @transform_2, window_bounds = array<i64: 1, 8, 32>}, {transform_indices = @transform_3, window_bounds = array<i64: 1, 8, 32>}, {transform_indices = @transform_4, window_bounds = array<i64: 1, 8, 8>}]} {
    %c0_i32 = arith.constant 0 : i32
    %0 = arith.cmpi eq, %arg2, %c0_i32 : i32
    %1 = arith.extui %0 : i1 to i32
    %c0_i32_0 = arith.constant 0 : i32
    %2 = arith.cmpi ne, %1, %c0_i32_0 : i32
    scf.if %2 {
      %cst_30 = arith.constant 0xFF800000 : f32
      %42 = vector.broadcast %cst_30 : f32 to vector<8x1xf32>
      %c0_31 = arith.constant 0 : index
      %c0_32 = arith.constant 0 : index
      %43 = vector.load %arg8[%c0_31, %c0_32] : memref<8x1xf32, #tpu.memory_space<vmem>>, vector<8x1xf32>
      tpu.vector_store %arg8[%c0_31, %c0_32], %42 {strides = array<i32>} : memref<8x1xf32, #tpu.memory_space<vmem>>, vector<8x1xf32>,
      %cst_33 = arith.constant 0.000000e+00 : f32
      %44 = vector.broadcast %cst_33 : f32 to vector<8x1xf32>
      %c0_34 = arith.constant 0 : index
      %c0_35 = arith.constant 0 : index
      %45 = vector.load %arg9[%c0_34, %c0_35] : memref<8x1xf32, #tpu.memory_space<vmem>>, vector<8x1xf32>
      tpu.vector_store %arg9[%c0_34, %c0_35], %44 {strides = array<i32>} : memref<8x1xf32, #tpu.memory_space<vmem>>, vector<8x1xf32>,
      %cst_36 = arith.constant 0.000000e+00 : f32
      %46 = vector.broadcast %cst_36 : f32 to vector<8x32xf32>
      %c0_37 = arith.constant 0 : index
      %c0_38 = arith.constant 0 : index
      %47 = vector.load %arg10[%c0_37, %c0_38] : memref<8x32xf32, #tpu.memory_space<vmem>>, vector<8x32xf32>
      tpu.vector_store %arg10[%c0_37, %c0_38], %46 {strides = array<i32>} : memref<8x32xf32, #tpu.memory_space<vmem>>, vector<8x32xf32>,
    } else {
    }
    %c0 = arith.constant 0 : index
    %c0_1 = arith.constant 0 : index
    %c0_2 = arith.constant 0 : index
    %3 = vector.load %arg3[%c0, %c0_1, %c0_2] : memref<1x8x32xf32, #tpu.memory_space<vmem>>, vector<1x8x32xf32>
    %4 = vector.shape_cast %3 : vector<1x8x32xf32> to vector<8x32xf32>
    %c0_3 = arith.constant 0 : index
    %c0_4 = arith.constant 0 : index
    %c0_5 = arith.constant 0 : index
    %5 = vector.load %arg4[%c0_3, %c0_4, %c0_5] : memref<1x8x32xf32, #tpu.memory_space<vmem>>, vector<1x8x32xf32>
    %6 = vector.shape_cast %5 : vector<1x8x32xf32> to vector<8x32xf32>
    %cst = arith.constant dense<0.000000e+00> : vector<8x8xf32>
    %7 = tpu.matmul %4, %6, %cst {dimension_numbers = #tpu.dot_dimension_numbers<[1], [1], [0], [0], [0, 0, 1, 0], [], []>} : vector<8x32xf32>, vector<8x32xf32>, vector<8x8xf32> -> vector<8x8xf32>
    %c0_6 = arith.constant 0 : index
    %c0_7 = arith.constant 0 : index
    %c0_8 = arith.constant 0 : index
    %8 = vector.load %arg7[%c0_6, %c0_7, %c0_8] : memref<1x8x8xf32, #tpu.memory_space<vmem>>, vector<1x8x8xf32>
    %9 = vector.shape_cast %8 : vector<1x8x8xf32> to vector<8x8xf32>
    %10 = vector.shape_cast %7 : vector<8x8xf32> to vector<1x8x8xf32>
    tpu.vector_store %arg7[%c0_6, %c0_7, %c0_8], %10 {strides = array<i32>} : memref<1x8x8xf32, #tpu.memory_space<vmem>>, vector<1x8x8xf32>,
    %cst_9 = arith.constant 0.176776692 : f32
    %11 = vector.broadcast %cst_9 : f32 to vector<8x8xf32>
    %12 = arith.mulf %7, %11 : vector<8x8xf32>
    %c0_10 = arith.constant 0 : index
    %c0_11 = arith.constant 0 : index
    %13 = vector.load %arg8[%c0_10, %c0_11] : memref<8x1xf32, #tpu.memory_space<vmem>>, vector<8x1xf32>
    %cst_12 = arith.constant dense<0xFF800000> : vector<8xf32>
    %14 = vector.multi_reduction <maximumf>, %12, %cst_12 [1] : vector<8x8xf32> to vector<8xf32>
    %15 = vector.shape_cast %14 : vector<8xf32> to vector<8x1xf32>
    %16 = arith.maximumf %13, %15 : vector<8x1xf32>
    %17 = arith.subf %13, %16 : vector<8x1xf32>
    %18 = math.exp %17 : vector<8x1xf32>
    %19 = vector.broadcast %16 : vector<8x1xf32> to vector<8x8xf32>
    %20 = arith.subf %12, %19 : vector<8x8xf32>
    %21 = math.exp %20 : vector<8x8xf32>
    %c0_13 = arith.constant 0 : index
    %c0_14 = arith.constant 0 : index
    %22 = vector.load %arg9[%c0_13, %c0_14] : memref<8x1xf32, #tpu.memory_space<vmem>>, vector<8x1xf32>
    %23 = arith.mulf %18, %22 : vector<8x1xf32>
    %cst_15 = arith.constant dense<0.000000e+00> : vector<8xf32>
    %24 = vector.multi_reduction <add>, %21, %cst_15 [1] : vector<8x8xf32> to vector<8xf32>
    %25 = vector.shape_cast %24 : vector<8xf32> to vector<8x1xf32>
    %26 = arith.addf %23, %25 : vector<8x1xf32>
    %c0_16 = arith.constant 0 : index
    %c0_17 = arith.constant 0 : index
    %27 = vector.load %arg9[%c0_16, %c0_17] : memref<8x1xf32, #tpu.memory_space<vmem>>, vector<8x1xf32>
    tpu.vector_store %arg9[%c0_16, %c0_17], %26 {strides = array<i32>} : memref<8x1xf32, #tpu.memory_space<vmem>>, vector<8x1xf32>,
    %c0_18 = arith.constant 0 : index
    %c0_19 = arith.constant 0 : index
    %c0_20 = arith.constant 0 : index
    %28 = vector.load %arg5[%c0_18, %c0_19, %c0_20] : memref<1x8x32xf32, #tpu.memory_space<vmem>>, vector<1x8x32xf32>
    %29 = vector.shape_cast %28 : vector<1x8x32xf32> to vector<8x32xf32>
    %30 = arith.truncf %21 : vector<8x8xf32> to vector<8x8xbf16>
    %31 = arith.truncf %29 : vector<8x32xf32> to vector<8x32xbf16>
    %cst_21 = arith.constant dense<0.000000e+00> : vector<8x32xf32>
    %32 = tpu.matmul %30, %31, %cst_21 {dimension_numbers = #tpu.dot_dimension_numbers<[1], [0], [0], [1], [0, 0, 1, 1], [], []>} : vector<8x8xbf16>, vector<8x32xbf16>, vector<8x32xf32> -> vector<8x32xf32>
    %c0_22 = arith.constant 0 : index
    %c0_23 = arith.constant 0 : index
    %33 = vector.load %arg10[%c0_22, %c0_23] : memref<8x32xf32, #tpu.memory_space<vmem>>, vector<8x32xf32>
    %34 = vector.broadcast %18 : vector<8x1xf32> to vector<8x32xf32>
    %35 = arith.mulf %34, %33 : vector<8x32xf32>
    %36 = arith.addf %35, %32 : vector<8x32xf32>
    %c0_24 = arith.constant 0 : index
    %c0_25 = arith.constant 0 : index
    %37 = vector.load %arg10[%c0_24, %c0_25] : memref<8x32xf32, #tpu.memory_space<vmem>>, vector<8x32xf32>
    tpu.vector_store %arg10[%c0_24, %c0_25], %36 {strides = array<i32>} : memref<8x32xf32, #tpu.memory_space<vmem>>, vector<8x32xf32>,
    %c0_26 = arith.constant 0 : index
    %c0_27 = arith.constant 0 : index
    %38 = vector.load %arg8[%c0_26, %c0_27] : memref<8x1xf32, #tpu.memory_space<vmem>>, vector<8x1xf32>
    tpu.vector_store %arg8[%c0_26, %c0_27], %16 {strides = array<i32>} : memref<8x1xf32, #tpu.memory_space<vmem>>, vector<8x1xf32>,
    %c0_i32_28 = arith.constant 0 : i32
    %39 = arith.cmpi eq, %arg2, %c0_i32_28 : i32
    %40 = arith.extui %39 : i1 to i32
    %c0_i32_29 = arith.constant 0 : i32
    %41 = arith.cmpi ne, %40, %c0_i32_29 : i32
    scf.if %41 {
      %c0_30 = arith.constant 0 : index
      %c0_31 = arith.constant 0 : index
      %42 = vector.load %arg9[%c0_30, %c0_31] : memref<8x1xf32, #tpu.memory_space<vmem>>, vector<8x1xf32>
      %43 = tpu.reciprocal %42 {approx = true} : vector<8x1xf32> -> vector<8x1xf32>
      %c0_32 = arith.constant 0 : index
      %c0_33 = arith.constant 0 : index
      %44 = vector.load %arg10[%c0_32, %c0_33] : memref<8x32xf32, #tpu.memory_space<vmem>>, vector<8x32xf32>
      %45 = vector.broadcast %43 : vector<8x1xf32> to vector<8x32xf32>
      %46 = arith.mulf %44, %45 : vector<8x32xf32>
      %c0_34 = arith.constant 0 : index
      %c0_35 = arith.constant 0 : index
      %c0_36 = arith.constant 0 : index
      %47 = vector.load %arg6[%c0_34, %c0_35, %c0_36] : memref<1x8x32xf32, #tpu.memory_space<vmem>>, vector<1x8x32xf32>
      %48 = vector.shape_cast %47 : vector<1x8x32xf32> to vector<8x32xf32>
      %49 = vector.shape_cast %46 : vector<8x32xf32> to vector<1x8x32xf32>
      tpu.vector_store %arg6[%c0_34, %c0_35, %c0_36], %49 {strides = array<i32>} : memref<1x8x32xf32, #tpu.memory_space<vmem>>, vector<1x8x32xf32>,
    } else {
    }
    return
  }
  func.func @transform_0(%arg0: i32, %arg1: i32, %arg2: i32) -> (i32, i32, i32) {
    %c0_i32 = arith.constant 0 : i32
    %c0_i32_0 = arith.constant 0 : i32
    return %arg0, %arg1, %c0_i32 : i32, i32, i32
  }
  func.func @transform_1(%arg0: i32, %arg1: i32, %arg2: i32) -> (i32, i32, i32) {
    %c0_i32 = arith.constant 0 : i32
    %c0_i32_0 = arith.constant 0 : i32
    return %arg0, %arg2, %c0_i32 : i32, i32, i32
  }
  func.func @transform_2(%arg0: i32, %arg1: i32, %arg2: i32) -> (i32, i32, i32) {
    %c0_i32 = arith.constant 0 : i32
    %c0_i32_0 = arith.constant 0 : i32
    return %arg0, %arg2, %c0_i32 : i32, i32, i32
  }
  func.func @transform_3(%arg0: i32, %arg1: i32, %arg2: i32) -> (i32, i32, i32) {
    %c0_i32 = arith.constant 0 : i32
    %c0_i32_0 = arith.constant 0 : i32
    return %arg0, %arg1, %c0_i32 : i32, i32, i32
  }
  func.func @transform_4(%arg0: i32, %arg1: i32, %arg2: i32) -> (i32, i32, i32) {
    %c0_i32 = arith.constant 0 : i32
    return %arg0, %arg1, %arg2 : i32, i32, i32
  }
}

</mosaic_0001>

<llo_original>
// kernel: tpu_custom_call.1
$region0: #{tpu_custom_call.1}
  #allocation0 [shape = 'u32[]', space=smem, size = 0x4, offset = 0x4, fixed_abs, tag = 'smem constant byte address 0x4 - core index']
  #allocation1 [shape = 'u32[144,128]{1,0:T(1,128)}', space=vmem, size = 0x12000, scoped, tag = 'internal scratch']
  #allocation2 [shape = 'f32[8,1]{1,0:T(8,128)}', space=vmem, size = 0x1000, scoped, tag = 'scratch operand']
  #allocation3 [shape = 'f32[8,1]{1,0:T(8,128)}', space=vmem, size = 0x1000, scoped, tag = 'scratch operand']
  #allocation4 [shape = 'f32[8,32]{1,0:T(8,128)}', space=vmem, size = 0x1000, scoped, tag = 'scratch operand']
  %s0 = inlined_call_operand.hbm [shape: f32[2,8,32], index: 0, kind: input, shape index: {}]
  %s1 = inlined_call_operand.hbm [shape: f32[2,8,32], index: 1, kind: input, shape index: {}]
  %s2 = inlined_call_operand.hbm [shape: f32[2,8,32], index: 2, kind: input, shape index: {}]
  %s3 = inlined_call_operand.hbm [shape: f32[2,8,32], index: 3, kind: output, shape index: {0}]
  %s4 = inlined_call_operand.hbm [shape: f32[2,8,8], index: 4, kind: output, shape index: {1}]
  %5 = xla_tuple %s3, %s4
  %s6 = sld [smem:[#allocation0]]
  $region73: #{tpu_custom_call.1} parent=0
    _
  %s8 = ssub.s32 1, %s6
  %s9 = scalar_select 0, %s8, %s6
  $region1: #{tpu_custom_call.1} parent=0
    #allocation5 [shape = 'u8[8192]{0}', space=vmem, size = 0x2000, scoped, tag = 'input window, operand 0']
    #allocation6 [shape = 's32[2]{0}', space=sflag, size = 0x8, scoped, tag = 'scoped memory for tpu_custom_call.1']
    #allocation7 [shape = 's32[2]{0}', space=sflag, size = 0x8, scoped, tag = 'scoped memory for tpu_custom_call.1']
    #allocation8 [shape = 'u8[8192]{0}', space=vmem, size = 0x2000, scoped, tag = 'input window, operand 1']
    #allocation9 [shape = 's32[2]{0}', space=sflag, size = 0x8, scoped, tag = 'scoped memory for tpu_custom_call.1']
    #allocation10 [shape = 'u8[8192]{0}', space=vmem, size = 0x2000, scoped, tag = 'input window, operand 2']
    #allocation11 [shape = 'u8[8192]{0}', space=vmem, size = 0x2000, scoped, tag = 'output window, operand 0']
    #allocation12 [shape = 'u8[8192]{0}', space=vmem, size = 0x2000, scoped, tag = 'output window, operand 1']
    #allocation13 [shape = 's32[2]{0}', space=sflag, size = 0x8, scoped, tag = 'scoped memory for tpu_custom_call.1']
    %10 = vsyncpa [#allocation6], 0
    %s11 = scalar_lea.sflag [#allocation6], 1
    %12 = vsyncpa %s11, 0
    %13 = vsyncpa [#allocation9], 0
    %s14 = scalar_lea.sflag [#allocation9], 1
    %15 = vsyncpa %s14, 0
    %16 = vsyncpa [#allocation7], 0
    %s17 = scalar_lea.sflag [#allocation7], 1
    %18 = vsyncpa %s17, 0
    %19 = vsyncpa [#allocation13], 0
    %s20 = scalar_lea.sflag [#allocation13], 1
    %21 = vsyncpa %s20, 0
    loop: start=0, step=1, limit=4
    $region2: #{tpu_custom_call.1} parent=1 // loop_pre_header
      _
    $region3: #{tpu_custom_call.1} parent=1 // loop_header
      %s23 = sphi 0, %s27
      %p24 = scmp.ge.s32.totalorder %s23, 4
      %s30 = sphi 0, %s49
      %s31 = sphi 0, %s45
      %s32 = sphi 0, %s41
      %s33 = sphi 0, %s30
      %s34 = sphi 0, %s31
      %s35 = sphi 0, %s32
      %s36 = sphi 0, %s33
      %s37 = sphi 0, %s34
      %s38 = sphi 0, %s35
      %s54 = sphi 0, %s56
      %s57 = sphi 0, %s54
      %s58 = sphi 0, %s57
      %s74 = sphi 0, %s58
      %s82 = sphi 0, %s84
      %s85 = sphi 0, %s82
      %s86 = sphi 0, %s85
      %s102 = sphi 0, %s86
      %s110 = sphi 0, %s112
      %s113 = sphi 0, %s110
      %s114 = sphi 0, %s113
      %s130 = sphi 0, %s114
      %s138 = sphi 0, %s140
      %s141 = sphi 0, %s138
      %s142 = sphi 0, %s141
      %s158 = sphi 0, %s142
      %s168 = sphi 0, %s170
      %s171 = sphi 0, %s168
      %s172 = sphi 0, %s171
      %s188 = sphi 0, %s172
    $region4: #{tpu_custom_call.1} parent=1 // loop_header_branch
      %26 = sbr.rel (%p24) target = $region8
    $region5: #{tpu_custom_call.1} parent=1 // loop_body
      %s28 = ssub.s32 %s23, 1
      %s29 = ssub.s32 %s23, 2
      %s39 = sadd.s32 1, %s32
      %p40 = scmp.ge.s32.totalorder %s39, 1
      %s41 = scalar_select %p40, 0, %s39
      %s42 = sadd.s32 1, %s31
      %s43 = scalar_select %p40, %s42, %s31
      %p44 = scmp.ge.s32.totalorder %s43, 1
      %s45 = scalar_select %p44, 0, %s43
      %s46 = sadd.s32 1, %s30
      %s47 = scalar_select %p44, %s46, %s30
      %p48 = scmp.ge.s32.totalorder %s47, 2
      %s49 = scalar_select %p48, 0, %s47
      %s50 = ssub.s32 %s30, %s49
      %s51 = ssub.s32 %s31, %s45
      %s52 = sor.u32 %s50, %s51
      %p53 = scmp.eq.s32.totalorder %s52, 0
      %s55 = sadd.s32 %s54, 1
      %s56 = scalar_select %p53, %s54, %s55
      %p59 = pneg %p53
      %p60 = scmp.eq.s32.totalorder %s23, 1
      %p61 = por %p59, %p60
      %p62 = scmp.ne.s32.totalorder %s54, %s57
      %p63 = scmp.eq.s32.totalorder %s23, 0
      %p64 = por %p62, %p63
      %p65 = scmp.ne.s32.totalorder %s54, %s57
      %p66 = scmp.eq.s32.totalorder %s28, 1
      %p67 = por %p65, %p66
      %p68 = scmp.ne.s32.totalorder %s57, %s58
      %p69 = scmp.eq.s32.totalorder %s28, 0
      %p70 = por %p68, %p69
      %p71 = scmp.ne.s32.totalorder %s57, %s58
      %p72 = scmp.eq.s32.totalorder %s29, 1
      %p73 = por %p71, %p72
      %p75 = scmp.ne.s32.totalorder %s58, %s74
      %p76 = scmp.eq.s32.totalorder %s29, 0
      %p77 = por %p75, %p76
      %s78 = ssub.s32 %s30, %s49
      %s79 = ssub.s32 %s32, %s41
      %s80 = sor.u32 %s78, %s79
      %p81 = scmp.eq.s32.totalorder %s80, 0
      %s83 = sadd.s32 %s82, 1
      %s84 = scalar_select %p81, %s82, %s83
      %p87 = pneg %p81
      %p88 = scmp.eq.s32.totalorder %s23, 1
      %p89 = por %p87, %p88
      %p90 = scmp.ne.s32.totalorder %s82, %s85
      %p91 = scmp.eq.s32.totalorder %s23, 0
      %p92 = por %p90, %p91
      %p93 = scmp.ne.s32.totalorder %s82, %s85
      %p94 = scmp.eq.s32.totalorder %s28, 1
      %p95 = por %p93, %p94
      %p96 = scmp.ne.s32.totalorder %s85, %s86
      %p97 = scmp.eq.s32.totalorder %s28, 0
      %p98 = por %p96, %p97
      %p99 = scmp.ne.s32.totalorder %s85, %s86
      %p100 = scmp.eq.s32.totalorder %s29, 1
      %p101 = por %p99, %p100
      %p103 = scmp.ne.s32.totalorder %s86, %s102
      %p104 = scmp.eq.s32.totalorder %s29, 0
      %p105 = por %p103, %p104
      %s106 = ssub.s32 %s30, %s49
      %s107 = ssub.s32 %s32, %s41
      %s108 = sor.u32 %s106, %s107
      %p109 = scmp.eq.s32.totalorder %s108, 0
      %s111 = sadd.s32 %s110, 1
      %s112 = scalar_select %p109, %s110, %s111
      %p115 = pneg %p109
      %p116 = scmp.eq.s32.totalorder %s23, 1
      %p117 = por %p115, %p116
      %p118 = scmp.ne.s32.totalorder %s110, %s113
      %p119 = scmp.eq.s32.totalorder %s23, 0
      %p120 = por %p118, %p119
      %p121 = scmp.ne.s32.totalorder %s110, %s113
      %p122 = scmp.eq.s32.totalorder %s28, 1
      %p123 = por %p121, %p122
      %p124 = scmp.ne.s32.totalorder %s113, %s114
      %p125 = scmp.eq.s32.totalorder %s28, 0
      %p126 = por %p124, %p125
      %p127 = scmp.ne.s32.totalorder %s113, %s114
      %p128 = scmp.eq.s32.totalorder %s29, 1
      %p129 = por %p127, %p128
      %p131 = scmp.ne.s32.totalorder %s114, %s130
      %p132 = scmp.eq.s32.totalorder %s29, 0
      %p133 = por %p131, %p132
      %s134 = ssub.s32 %s30, %s49
      %s135 = ssub.s32 %s31, %s45
      %s136 = sor.u32 %s134, %s135
      %p137 = scmp.eq.s32.totalorder %s136, 0
      %s139 = sadd.s32 %s138, 1
      %s140 = scalar_select %p137, %s138, %s139
      %p143 = pneg %p137
      %p144 = scmp.eq.s32.totalorder %s23, 1
      %p145 = por %p143, %p144
      %p146 = scmp.ne.s32.totalorder %s138, %s141
      %p147 = scmp.eq.s32.totalorder %s23, 0
      %p148 = por %p146, %p147
      %p149 = scmp.ne.s32.totalorder %s138, %s141
      %p150 = scmp.eq.s32.totalorder %s28, 1
      %p151 = por %p149, %p150
      %p152 = scmp.ne.s32.totalorder %s141, %s142
      %p153 = scmp.eq.s32.totalorder %s28, 0
      %p154 = por %p152, %p153
      %p155 = scmp.ne.s32.totalorder %s141, %s142
      %p156 = scmp.eq.s32.totalorder %s29, 1
      %p157 = por %p155, %p156
      %p159 = scmp.ne.s32.totalorder %s142, %s158
      %p160 = scmp.eq.s32.totalorder %s29, 0
      %p161 = por %p159, %p160
      %s162 = ssub.s32 %s30, %s49
      %s163 = ssub.s32 %s31, %s45
      %s164 = sor.u32 %s162, %s163
      %s165 = ssub.s32 %s32, %s41
      %s166 = sor.u32 %s164, %s165
      %p167 = scmp.eq.s32.totalorder %s166, 0
      %s169 = sadd.s32 %s168, 1
      %s170 = scalar_select %p167, %s168, %s169
      %p173 = pneg %p167
      %p174 = scmp.eq.s32.totalorder %s23, 1
      %p175 = por %p173, %p174
      %p176 = scmp.ne.s32.totalorder %s168, %s171
      %p177 = scmp.eq.s32.totalorder %s23, 0
      %p178 = por %p176, %p177
      %p179 = scmp.ne.s32.totalorder %s168, %s171
      %p180 = scmp.eq.s32.totalorder %s28, 1
      %p181 = por %p179, %p180
      %p182 = scmp.ne.s32.totalorder %s171, %s172
      %p183 = scmp.eq.s32.totalorder %s28, 0
      %p184 = por %p182, %p183
      %p185 = scmp.ne.s32.totalorder %s171, %s172
      %p186 = scmp.eq.s32.totalorder %s29, 1
      %p187 = por %p185, %p186
      %p189 = scmp.ne.s32.totalorder %s172, %s188
      %p190 = scmp.eq.s32.totalorder %s29, 0
      %p191 = por %p189, %p190
      %p192 = scmp.le.s32.totalorder 1, %s23
      %p193 = scmp.lt.s32.totalorder %s23, 3
      %p194 = pnand %p192, %p193
      %p195 = pneg %p194
      // Predicated region
      $region9: #{tpu_custom_call.1} parent=5 // pred_check
        _
      $region10: #{tpu_custom_call.1} parent=5 // pred_check_branch
        %197 = sbr.rel (%p194) target = $region12
      $region11: #{tpu_custom_call.1} parent=5 // pred_region
        %s198 = ssub.s32 %s23, 1
      $region12: #{tpu_custom_call.1} parent=5 // pred_fallthru
        _
      %p199 = scmp.lt.s32.totalorder %s23, 2
      // Predicated region
      $region13: #{tpu_custom_call.1} parent=5 // pred_check
        %p200 = pneg %p199
      $region14: #{tpu_custom_call.1} parent=5 // pred_check_branch
        %202 = sbr.rel (%p200) target = $region16
      $region15: #{tpu_custom_call.1} parent=5 // pred_region
        // Predicated region
        $region17: #{tpu_custom_call.1} parent=15 // pred_check
          %p203 = pneg %p64
        $region18: #{tpu_custom_call.1} parent=15 // pred_check_branch
          %205 = sbr.rel (%p203) target = $region20
        $region19: #{tpu_custom_call.1} parent=15 // pred_region
          %s206 = sand.u32 %s54, 1
          %s207 = scalar_lea.sflag [#allocation6], %s206
          %s208 = sand.u32 %s54, 1
          %s209 = smul.addr %s208, 8
          %s210 = scalar_lea.vmem [#allocation5], %s209
          %s212 = ssub.s32 128, 128
          %213 = vsyncadd %s207, %s212
          %s214 = sadd.s32 %s31, %s30
          %s215 = smul.addr %s214, 128
          %s216 = scalar_lea.hbm %s0, %s215
          %s218 = sshll.u32 %s210, 4
          %s219 = int_to_ptr.vmem [resolvable:$true] %s218
          %221 = dma.hbm_to_vmem [thread:$0]  %s216, 128, %s219, %s207
        $region20: #{tpu_custom_call.1} parent=15 // pred_fallthru
          _
        // Predicated region
        $region21: #{tpu_custom_call.1} parent=15 // pred_check
          %p222 = pneg %p92
        $region22: #{tpu_custom_call.1} parent=15 // pred_check_branch
          %224 = sbr.rel (%p222) target = $region24
        $region23: #{tpu_custom_call.1} parent=15 // pred_region
          %s225 = sand.u32 %s23, 1
          %s226 = scalar_lea.sflag [#allocation9], %s225
          %s227 = sand.u32 %s82, 1
          %s228 = smul.addr %s227, 8
          %s229 = scalar_lea.vmem [#allocation8], %s228
          %s231 = ssub.s32 128, 128
          %232 = vsyncadd %s226, %s231
          %s233 = sadd.s32 %s32, %s30
          %s234 = smul.addr %s233, 128
          %s235 = scalar_lea.hbm %s1, %s234
          %s237 = sshll.u32 %s229, 4
          %s238 = int_to_ptr.vmem [resolvable:$true] %s237
          %240 = dma.hbm_to_vmem [thread:$0]  %s235, 128, %s238, %s226
        $region24: #{tpu_custom_call.1} parent=15 // pred_fallthru
          _
        // Predicated region
        $region25: #{tpu_custom_call.1} parent=15 // pred_check
          %p241 = pneg %p120
        $region26: #{tpu_custom_call.1} parent=15 // pred_check_branch
          %243 = sbr.rel (%p241) target = $region28
        $region27: #{tpu_custom_call.1} parent=15 // pred_region
          %s244 = sand.u32 %s23, 1
          %s245 = scalar_lea.sflag [#allocation9], %s244
          %s246 = sand.u32 %s110, 1
          %s247 = smul.addr %s246, 8
          %s248 = scalar_lea.vmem [#allocation10], %s247
          %s250 = ssub.s32 128, 128
          %251 = vsyncadd %s245, %s250
          %s252 = sadd.s32 %s32, %s30
          %s253 = smul.addr %s252, 128
          %s254 = scalar_lea.hbm %s2, %s253
          %s256 = sshll.u32 %s248, 4
          %s257 = int_to_ptr.vmem [resolvable:$true] %s256
          %259 = dma.hbm_to_vmem [thread:$0]  %s254, 128, %s257, %s245
        $region28: #{tpu_custom_call.1} parent=15 // pred_fallthru
          _
      $region16: #{tpu_custom_call.1} parent=5 // pred_fallthru
        _
      %p260 = scmp.le.s32.totalorder 1, %s23
      %p261 = scmp.lt.s32.totalorder %s23, 3
      %p262 = pnand %p260, %p261
      %p263 = pneg %p262
      // Predicated region
      $region29: #{tpu_custom_call.1} parent=5 // pred_check
        _
      $region30: #{tpu_custom_call.1} parent=5 // pred_check_branch
        %265 = sbr.rel (%p262) target = $region32
      $region31: #{tpu_custom_call.1} parent=5 // pred_region
        %s266 = ssub.s32 %s23, 1
        %s267 = sand.u32 %s57, 1
        %s268 = scalar_lea.sflag [#allocation6], %s267
        %s269 = sand.u32 %s57, 1
        %s270 = smul.addr %s269, 8
        %s271 = scalar_lea.vmem [#allocation5], %s270
        // Predicated region
        $region33: #{tpu_custom_call.1} parent=31 // pred_check
          %p272 = pneg %p70
        $region34: #{tpu_custom_call.1} parent=31 // pred_check_branch
          %274 = sbr.rel (%p272) target = $region36
        $region35: #{tpu_custom_call.1} parent=31 // pred_region
          %275 = dma.done %s268, 128
        $region36: #{tpu_custom_call.1} parent=31 // pred_fallthru
          _
        %s276 = sand.u32 %s28, 1
        %s277 = scalar_lea.sflag [#allocation9], %s276
        %s278 = sand.u32 %s85, 1
        %s279 = smul.addr %s278, 8
        %s280 = scalar_lea.vmem [#allocation8], %s279
        // Predicated region
        $region37: #{tpu_custom_call.1} parent=31 // pred_check
          %p281 = pneg %p98
        $region38: #{tpu_custom_call.1} parent=31 // pred_check_branch
          %283 = sbr.rel (%p281) target = $region40
        $region39: #{tpu_custom_call.1} parent=31 // pred_region
          %284 = dma.done %s277, 128
        $region40: #{tpu_custom_call.1} parent=31 // pred_fallthru
          _
        %s285 = sand.u32 %s28, 1
        %s286 = scalar_lea.sflag [#allocation9], %s285
        %s287 = sand.u32 %s113, 1
        %s288 = smul.addr %s287, 8
        %s289 = scalar_lea.vmem [#allocation10], %s288
        // Predicated region
        $region41: #{tpu_custom_call.1} parent=31 // pred_check
          %p290 = pneg %p126
        $region42: #{tpu_custom_call.1} parent=31 // pred_check_branch
          %292 = sbr.rel (%p290) target = $region44
        $region43: #{tpu_custom_call.1} parent=31 // pred_region
          %293 = dma.done %s286, 128
        $region44: #{tpu_custom_call.1} parent=31 // pred_fallthru
          _
        %s294 = sand.u32 %s57, 1
        %s295 = scalar_lea.sflag [#allocation6], %s294
        %s296 = sand.u32 %s57, 1
        %s297 = smul.addr %s296, 8
        %s298 = scalar_lea.vmem [#allocation5], %s297
        %p299 = pneg %p70
        %p300 = pneg %p67
        %s301 = sand.u32 %s28, 1
        %s302 = scalar_lea.sflag [#allocation9], %s301
        %s303 = sand.u32 %s85, 1
        %s304 = smul.addr %s303, 8
        %s305 = scalar_lea.vmem [#allocation8], %s304
        %p306 = pneg %p98
        %p307 = pneg %p95
        %s308 = sand.u32 %s28, 1
        %s309 = scalar_lea.sflag [#allocation9], %s308
        %s310 = sand.u32 %s113, 1
        %s311 = smul.addr %s310, 8
        %s312 = scalar_lea.vmem [#allocation10], %s311
        %p313 = pneg %p126
        %p314 = pneg %p123
        %p315 = pneg %p154
        %p316 = pneg %p151
        %s317 = sand.u32 %s141, 1
        %s318 = scalar_lea.sflag [#allocation7], %s317
        %s319 = sand.u32 %s141, 1
        %s320 = smul.addr %s319, 8
        %s321 = scalar_lea.vmem [#allocation11], %s320
        %p322 = pneg %p184
        %p323 = pneg %p181
        %s324 = sand.u32 %s171, 1
        %s325 = scalar_lea.sflag [#allocation13], %s324
        %s326 = sand.u32 %s171, 1
        %s327 = smul.addr %s326, 8
        %s328 = scalar_lea.vmem [#allocation12], %s327
        %p330 = scmp.eq.s32.totalorder %s35, 0
        // Predicated region
        $region45: #{tpu_custom_call.1} parent=31 // pred_check
          %p331 = pneg %p330
        $region46: #{tpu_custom_call.1} parent=31 // pred_check_branch
          %333 = sbr.rel (%p331) target = $region48
        $region47: #{tpu_custom_call.1} parent=31 // pred_region
          %vm334 = vcmask 7168
          %335 = vst.msk [vmem:[#allocation2] sm:$0xff] %vm334, -inf
          %336 = vst.msk [vmem:[#allocation3] sm:$0xff] %vm334, 0.0
          %vm337 = vcmask 261120
          %338 = vst.msk [vmem:[#allocation4] sm:$0xff] %vm337, 0.0
        $region48: #{tpu_custom_call.1} parent=31 // pred_fallthru
          _
        %v339 = vld [vmem:[%s271] sm:$0xff]
        %v340 = vld [vmem:[%s280] sm:$0xff]
        %vm341 = vcmask 261120
        %v343 = vsel %vm341, %v339, 0
        %v346 = vsel %vm341, %v340, 0
        %348 = vmatprep.subr.mxu0 0.0
        %349 = vmatpush1.xpose.msra.mxu0 0.0
        %350 = vmatprep.subr.mxu0 0.0
        %351 = vmatpush1.xpose.msra.mxu0 0.0
        %352 = vmatprep.subr.mxu0 0.0
        %353 = vmatpush1.xpose.msra.mxu0 0.0
        %354 = vmatprep.subr.mxu0 0.0
        %355 = vmatpush1.xpose.msra.mxu0 0.0
        %356 = vmatprep.subr.mxu0 0.0
        %357 = vmatpush1.xpose.msra.mxu0 0.0
        %358 = vmatprep.subr.mxu0 0.0
        %359 = vmatpush1.xpose.msra.mxu0 0.0
        %360 = vmatprep.subr.mxu0 0.0
        %361 = vmatpush1.xpose.msra.mxu0 0.0
        %362 = vmatprep.subr.mxu0 0.0
        %363 = vmatpush1.xpose.msra.mxu0 0.0
        %364 = vmatprep.subr.mxu0 0.0
        %365 = vmatpush1.xpose.msra.mxu0 0.0
        %366 = vmatprep.subr.mxu0 0.0
        %367 = vmatpush1.xpose.msra.mxu0 0.0
        %368 = vmatprep.subr.mxu0 0.0
        %369 = vmatpush1.xpose.msra.mxu0 0.0
        %370 = vmatprep.subr.mxu0 0.0
        %371 = vmatpush1.xpose.msra.mxu0 0.0
        %372 = vmatprep.subr.mxu0 0.0
        %373 = vmatpush1.xpose.msra.mxu0 0.0
        %374 = vmatprep.subr.mxu0 0.0
        %375 = vmatpush1.xpose.msra.mxu0 0.0
        %376 = vmatprep.subr.mxu0 0.0
        %377 = vmatpush1.xpose.msra.mxu0 0.0
        %378 = vmatprep.subr.mxu0 0.0
        %379 = vmatpush1.xpose.msra.mxu0 %v346
        %380 = vmatprep.subr.mxu0 0.0
        %381 = vmatpush2.xpose.msra.mxu0 0.0
        %382 = vmatprep.subr.mxu0 0.0
        %383 = vmatpush2.xpose.msra.mxu0 0.0
        %384 = vmatprep.subr.mxu0 0.0
        %385 = vmatpush2.xpose.msra.mxu0 0.0
        %386 = vmatprep.subr.mxu0 0.0
        %387 = vmatpush2.xpose.msra.mxu0 0.0
        %388 = vmatprep.subr.mxu0 0.0
        %389 = vmatpush2.xpose.msra.mxu0 0.0
        %390 = vmatprep.subr.mxu0 0.0
        %391 = vmatpush2.xpose.msra.mxu0 0.0
        %392 = vmatprep.subr.mxu0 0.0
        %393 = vmatpush2.xpose.msra.mxu0 0.0
        %394 = vmatprep.subr.mxu0 0.0
        %395 = vmatpush2.xpose.msra.mxu0 0.0
        %396 = vmatprep.subr.mxu0 0.0
        %397 = vmatpush2.xpose.msra.mxu0 0.0
        %398 = vmatprep.subr.mxu0 0.0
        %399 = vmatpush2.xpose.msra.mxu0 0.0
        %400 = vmatprep.subr.mxu0 0.0
        %401 = vmatpush2.xpose.msra.mxu0 0.0
        %402 = vmatprep.subr.mxu0 0.0
        %403 = vmatpush2.xpose.msra.mxu0 0.0
        %404 = vmatprep.subr.mxu0 0.0
        %405 = vmatpush2.xpose.msra.mxu0 0.0
        %406 = vmatprep.subr.mxu0 0.0
        %407 = vmatpush2.xpose.msra.mxu0 0.0
        %408 = vmatprep.subr.mxu0 0.0
        %409 = vmatpush2.xpose.msra.mxu0 0.0
        %410 = vmatprep.subr.mxu0 0.0
        %411 = vmatpush2.xpose.msra.mxu0 0.0
        %412 = vmatprep.mubr.f32.mxu0 0.0
        %413 = vmatmul.mubr.f32.gmra.mxu0 %v343
        %v414 = vpop.f32.mrf.mxu0
        %v415 = vadd.f32 0.0, %v414
        %v416 = vpop.f32.mrf.mxu0
        %417 = vdwg.mxu0
        %vm418 = vcmask 64512
        %419 = vst.msk [vmem:[%s328] sm:$0xff] %vm418, %v415
        %v420 = vmul.f32 %v415, 0.17677669
        %v421 = vld [vmem:[#allocation2] sm:$0xff]
        %v422 = vsel %vm418, %v420, -inf
        %423 = vmax.xlane.f32.xlu0 %v422
        %v424 = vpop.xlane.xlu0 %423
        %v425 = vmax.f32 %v421, %v424
        %v426 = vsub.f32 %v421, %v425
        %v427 = vmul.f32 %v426, 1.442695
        %v428 = vpow.pop %v427
        %430 = vset.pattern.permute.xlu0 0
        %431 = vperm.xlu0 %430, %v425
        %v432 = vpop.permute.xlu0 %431
        %v434 = vsub.f32 %v420, %v432
        %v435 = vmul.f32 %v434, 1.442695
        %v436 = vpow.pop %v435
        %v437 = vld [vmem:[#allocation3] sm:$0xff]
        %v438 = vmul.f32 %v428, %v437
        %v439 = vsel %vm418, %v436, 0.0
        %440 = vadd.xlane.f32.xlu0 %v439
        %v441 = vpop.xlane.xlu0 %440
        %v442 = vadd.f32 %v438, %v441
        %vm443 = vcmask 7168
        %444 = vst.msk [vmem:[#allocation3] sm:$0xff] %vm443, %v442
        %v445 = vld [vmem:[%s289] sm:$0xff]
        %v446 = vpack.c.bf16 %v436, %v436
        %v447 = vpack.c.bf16 %v445, %v445
        %v449 = vsel %vm418, %v446, 0
        %vm451 = vcmask 1043456
        %v453 = vsel %vm451, %v447, 0
        %455 = vmatprep.subr.bf16.mxu0 0
        %456 = vmatpush1.bf16.msra.mxu0 0
        %457 = vmatprep.subr.bf16.mxu0 0
        %458 = vmatpush1.bf16.msra.mxu0 0
        %459 = vmatprep.subr.bf16.mxu0 0
        %460 = vmatpush1.bf16.msra.mxu0 0
        %461 = vmatprep.subr.bf16.mxu0 0
        %462 = vmatpush1.bf16.msra.mxu0 0
        %463 = vmatprep.subr.bf16.mxu0 0
        %464 = vmatpush1.bf16.msra.mxu0 0
        %465 = vmatprep.subr.bf16.mxu0 0
        %466 = vmatpush1.bf16.msra.mxu0 0
        %467 = vmatprep.subr.bf16.mxu0 0
        %468 = vmatpush1.bf16.msra.mxu0 0
        %469 = vmatprep.subr.bf16.mxu0 0
        %470 = vmatpush1.bf16.msra.mxu0 %v453
        %471 = vmatprep.subr.bf16.mxu0 0
        %472 = vmatpush2.bf16.msra.mxu0 0
        %473 = vmatprep.subr.bf16.mxu0 0
        %474 = vmatpush2.bf16.msra.mxu0 0
        %475 = vmatprep.subr.bf16.mxu0 0
        %476 = vmatpush2.bf16.msra.mxu0 0
        %477 = vmatprep.subr.bf16.mxu0 0
        %478 = vmatpush2.bf16.msra.mxu0 0
        %479 = vmatprep.subr.bf16.mxu0 0
        %480 = vmatpush2.bf16.msra.mxu0 0
        %481 = vmatprep.subr.bf16.mxu0 0
        %482 = vmatpush2.bf16.msra.mxu0 0
        %483 = vmatprep.subr.bf16.mxu0 0
        %484 = vmatpush2.bf16.msra.mxu0 0
        %485 = vmatprep.subr.bf16.mxu0 0
        %486 = vmatpush2.bf16.msra.mxu0 0
        %487 = vmatprep.mubr.bf16.mxu0 0
        %488 = vmatmul.mubr.bf16.gmra.mxu0 %v449
        %v489 = vpop.f32.mrf.mxu0
        %v490 = vadd.f32 0.0, %v489
        %v491 = vpop.f32.mrf.mxu0
        %v492 = vpop.f32.mrf.mxu0
        %v493 = vpop.f32.mrf.mxu0
        %494 = vdwg.mxu0
        %v495 = vld [vmem:[#allocation4] sm:$0xff]
        %497 = vset.pattern.permute.xlu0 0
        %498 = vperm.xlu0 %497, %v428
        %v499 = vpop.permute.xlu0 %498
        %v501 = vmul.f32 %v499, %v495
        %v502 = vadd.f32 %v501, %v490
        %503 = vst.msk [vmem:[#allocation4] sm:$0xff] %vm341, %v502
        %504 = vst.msk [vmem:[#allocation2] sm:$0xff] %vm443, %v425
        // Predicated region
        $region49: #{tpu_custom_call.1} parent=31 // pred_check
          %p505 = pneg %p330
        $region50: #{tpu_custom_call.1} parent=31 // pred_check_branch
          %507 = sbr.rel (%p505) target = $region52
        $region51: #{tpu_custom_call.1} parent=31 // pred_region
          %v508 = vld [vmem:[#allocation3] sm:$0xff]
          %v509 = vrcp.pop %v508
          %v510 = vld [vmem:[#allocation4] sm:$0xff]
          %512 = vset.pattern.permute.xlu0 0
          %513 = vperm.xlu0 %512, %v509
          %v514 = vpop.permute.xlu0 %513
          %v516 = vmul.f32 %v510, %v514
          %517 = vst.msk [vmem:[%s321] sm:$0xff] %vm341, %v516
        $region52: #{tpu_custom_call.1} parent=31 // pred_fallthru
          _
        %s518 = sand.u32 %s141, 1
        %s519 = scalar_lea.sflag [#allocation7], %s518
        %s520 = sand.u32 %s141, 1
        %s521 = smul.addr %s520, 8
        %s522 = scalar_lea.vmem [#allocation11], %s521
        %s523 = sand.u32 %s171, 1
        %s524 = scalar_lea.sflag [#allocation13], %s523
        %s525 = sand.u32 %s171, 1
        %s526 = smul.addr %s525, 8
        %s527 = scalar_lea.vmem [#allocation12], %s526
        // Predicated region
        $region53: #{tpu_custom_call.1} parent=31 // pred_check
          %p528 = pneg %p151
        $region54: #{tpu_custom_call.1} parent=31 // pred_check_branch
          %530 = sbr.rel (%p528) target = $region56
        $region55: #{tpu_custom_call.1} parent=31 // pred_region
          %s532 = ssub.s32 128, 128
          %533 = vsyncadd %s519, %s532
          %s534 = sadd.s32 %s34, %s33
          %s535 = smul.addr %s534, 128
          %s536 = scalar_lea.hbm %s3, %s535
          %s538 = sshll.u32 %s522, 4
          %s539 = int_to_ptr.vmem [resolvable:$true] %s538
          %541 = dma.vmem_to_hbm [thread:$0]  %s539, 128, %s536, %s519
        $region56: #{tpu_custom_call.1} parent=31 // pred_fallthru
          _
        // Predicated region
        $region57: #{tpu_custom_call.1} parent=31 // pred_check
          %p542 = pneg %p181
        $region58: #{tpu_custom_call.1} parent=31 // pred_check_branch
          %544 = sbr.rel (%p542) target = $region60
        $region59: #{tpu_custom_call.1} parent=31 // pred_region
          %s546 = ssub.s32 128, 128
          %547 = vsyncadd %s524, %s546
          %s548 = sadd.s32 %s35, %s34
          %s549 = sadd.s32 %s548, %s33
          %s550 = smul.addr %s549, 128
          %s551 = scalar_lea.hbm %s4, %s550
          %s553 = sshll.u32 %s527, 4
          %s554 = int_to_ptr.vmem [resolvable:$true] %s553
          %556 = dma.vmem_to_hbm [thread:$0]  %s554, 128, %s551, %s524
        $region60: #{tpu_custom_call.1} parent=31 // pred_fallthru
          _
      $region32: #{tpu_custom_call.1} parent=5 // pred_fallthru
        _
      %p557 = scmp.le.s32.totalorder 2, %s23
      // Predicated region
      $region61: #{tpu_custom_call.1} parent=5 // pred_check
        %p558 = pneg %p557
      $region62: #{tpu_custom_call.1} parent=5 // pred_check_branch
        %560 = sbr.rel (%p558) target = $region64
      $region63: #{tpu_custom_call.1} parent=5 // pred_region
        %s561 = ssub.s32 %s23, 2
        // Predicated region
        $region65: #{tpu_custom_call.1} parent=63 // pred_check
          %p562 = pneg %p157
        $region66: #{tpu_custom_call.1} parent=63 // pred_check_branch
          %564 = sbr.rel (%p562) target = $region68
        $region67: #{tpu_custom_call.1} parent=63 // pred_region
          %s565 = sand.u32 %s142, 1
          %s566 = scalar_lea.sflag [#allocation7], %s565
          %s567 = sand.u32 %s142, 1
          %s568 = smul.addr %s567, 8
          %s569 = scalar_lea.vmem [#allocation11], %s568
          %570 = dma.done %s566, 128
        $region68: #{tpu_custom_call.1} parent=63 // pred_fallthru
          _
        // Predicated region
        $region69: #{tpu_custom_call.1} parent=63 // pred_check
          %p571 = pneg %p187
        $region70: #{tpu_custom_call.1} parent=63 // pred_check_branch
          %573 = sbr.rel (%p571) target = $region72
        $region71: #{tpu_custom_call.1} parent=63 // pred_region
          %s574 = sand.u32 %s172, 1
          %s575 = scalar_lea.sflag [#allocation13], %s574
          %s576 = sand.u32 %s172, 1
          %s577 = smul.addr %s576, 8
          %s578 = scalar_lea.vmem [#allocation12], %s577
          %579 = dma.done %s575, 128
        $region72: #{tpu_custom_call.1} parent=63 // pred_fallthru
          _
      $region64: #{tpu_custom_call.1} parent=5 // pred_fallthru
        _
    $region6: #{tpu_custom_call.1} parent=1 // loop_footer
      %s27 = sadd.s32 1, %s23
    $region7: #{tpu_custom_call.1} parent=1 // loop_footer_branch
      %22 = sbr.rel target = $region3
    $region8: #{tpu_custom_call.1} parent=1 // loop_exit
      _
    %580 = vsyncpa [#allocation6], 1
    %s581 = scalar_lea.sflag [#allocation6], 1
    %582 = vsyncpa %s581, 1
    %583 = vsyncpa [#allocation9], 1
    %s584 = scalar_lea.sflag [#allocation9], 1
    %585 = vsyncpa %s584, 1
    %586 = vsyncpa [#allocation7], 1
    %s587 = scalar_lea.sflag [#allocation7], 1
    %588 = vsyncpa %s587, 1
    %589 = vsyncpa [#allocation13], 1
    %s590 = scalar_lea.sflag [#allocation13], 1
    %591 = vsyncpa %s590, 1

</llo_original>
